<compile_context>
chip_gen: v6e
topology: v6e:2x2x1
jax: 0.10.0
libtpu: 0.0.40
codegen_flags: <defaults>
</compile_context>

<pallas_src>
import jax
import jax.numpy as jnp
from jax.experimental import pallas as pl
from jax.experimental.pallas import tpu as pltpu


def _pair(v):
    return (v, v) if isinstance(v, int) else tuple(v)


def _cdiv(a, b):
    return -(-a // b)


def _round_up(a, b):
    return _cdiv(a, b) * b


def _prefer_f32_max(dtype):
    """v5e has no narrow-float VPU datapath; hoist bf16/f16 max to f32 there."""
    if jnp.dtype(dtype).itemsize >= 4:
        return False
    try:
        kind = jax.devices()[0].device_kind.lower()
    except Exception:
        return True
    return "v5" in kind


def _make_kernel(H, W, oh, ow, out_dtype, max_in_f32):
    def kernel(x_ref, o_ref):
        # x_ref: (TN, TC, H, W)  -- W on lanes, H on sublanes (NCHW-native, no transpose)
        # o_ref: (TN, 2, TC, oh*ow) -- [avg, max] fused output block
        avg_cells = []
        max_cells = []
        for i in range(oh):
            h0 = (i * H) // oh
            h1 = -(-((i + 1) * H) // oh)  # ceil, PyTorch adaptive-pool window bounds
            band = x_ref[:, :, h0:h1, :]               # (TN, TC, kh, W)
            band_f32 = band.astype(jnp.float32)
            # H (sublane-axis) reduction via XLU; only this band is live at a time.
            band_sum = jnp.sum(band_f32, axis=2)       # (TN, TC, W) f32
            band_max = jnp.max(band_f32 if max_in_f32 else band, axis=2)
            for j in range(ow):
                w0 = (j * W) // ow
                w1 = -(-((j + 1) * W) // ow)
                # W (lane-axis) reduction on the small band intermediate.
                cell_sum = jnp.sum(band_sum[:, :, w0:w1], axis=-1)   # (TN, TC)
                cell_max = jnp.max(band_max[:, :, w0:w1], axis=-1)   # (TN, TC)
                inv_count = 1.0 / float((h1 - h0) * (w1 - w0))
                avg_cells.append(cell_sum * inv_count)
                max_cells.append(cell_max)
        avg = jnp.stack(avg_cells, axis=-1).astype(out_dtype)   # (TN, TC, oh*ow)
        mx = jnp.stack(max_cells, axis=-1).astype(out_dtype)    # (TN, TC, oh*ow)
        o_ref[:, 0, :, :] = avg
        o_ref[:, 1, :, :] = mx

    return kernel


def _choose_tiles(N, C, H, W, oh, ow, itemsize):
    """Pick (TN, TC, vmem_limit) from an HBM-bytes budget and a padded-VMEM budget."""
    HBM_BUDGET = 8 << 20   # actual input HBM bytes per grid step (amortize ~0.35us/step)
    VMEM_CAP = 26 << 20    # padded VMEM target per step (safe under v7x's 64 MiB phys)

    sub_in = 8 * max(1, 4 // itemsize)                     # sublane packing granularity
    plane_hbm = H * W * itemsize                           # real bytes of one (n,c) plane
    plane_pad = _round_up(H, sub_in) * _round_up(W, 128) * itemsize   # VMEM footprint
    cells_pad = _round_up(oh * ow, 128)
    kh_max = min(H, _cdiv(H, oh) + 1)                      # largest adaptive window rows
    w_pad32 = _round_up(W, 128) * 4
    # Worst-case in-kernel f32 intermediates per (n, c): one band copy + sum/max rows.
    plane_work = _round_up(kh_max, 8) * w_pad32 + 2 * w_pad32

    # Channel tile: full C unless one image's channel slab alone blows the HBM budget.
    if C % 128 == 0 and C > 128:
        c_step = 128
    elif C % 8 == 0 and C > 8:
        c_step = 8        # output block dim -2 must stay 8-divisible (or == C)
    else:
        c_step = C
    TC = C
    if c_step < C and TC * plane_hbm > HBM_BUDGET:
        TC = max(c_step, (HBM_BUDGET // (c_step * plane_hbm)) * c_step)

    def per_img_vmem(tc):
        out_pad = 2 * 2 * _round_up(tc, sub_in) * cells_pad * itemsize  # dbl-buffered out
        return tc * (2 * plane_pad + plane_work) + out_pad              # dbl-buffered in

    per_img_hbm = TC * plane_hbm
    TN = max(1, min(HBM_BUDGET // max(1, per_img_hbm),
                    VMEM_CAP // max(1, per_img_vmem(TC))))
    TN = min(TN, N)

    # Ensure >= 2 grid steps when possible so both v7x TensorCores get work.
    if _cdiv(N, TN) * _cdiv(C, TC) < 2:
        if N >= 2:
            TN = _cdiv(N, 2)
        elif c_step < C:
            TC = _round_up(_cdiv(C, 2), c_step)

    vmem_needed = TN * per_img_vmem(TC) + (2 << 20)
    vmem_limit = int(min(max(vmem_needed, 16 << 20), 64 << 20))
    return TN, TC, vmem_limit


def adaptive_concat_pool2d(x, target_size):
    """Pallas implementation of AdaptiveConcatPool2d.forward (NCHW in / NCHW out)."""
    N, C, H, W = x.shape
    oh, ow = _pair(target_size)
    itemsize = jnp.dtype(x.dtype).itemsize

    TN, TC, vmem_limit = _choose_tiles(N, C, H, W, oh, ow, itemsize)
    grid = (_cdiv(N, TN), _cdiv(C, TC))

    kernel = _make_kernel(H, W, oh, ow, x.dtype, _prefer_f32_max(x.dtype))

    out = pl.pallas_call(
        kernel,
        out_shape=jax.ShapeDtypeStruct((N, 2, C, oh * ow), x.dtype),
        grid=grid,
        in_specs=[pl.BlockSpec((TN, TC, H, W), lambda n, c: (n, c, 0, 0))],
        out_specs=pl.BlockSpec((TN, 2, TC, oh * ow), lambda n, c: (n, 0, c, 0)),
        compiler_params=pltpu.CompilerParams(
            dimension_semantics=("parallel", "parallel"),
            vmem_limit_bytes=vmem_limit,
        ),
    )(x)

    # (N, 2, C, oh*ow) -> (N, 2*C, oh, ow): contiguous dim merges/splits only — a pure
    # metadata reshape, no extra HBM pass.  Avg channels first, max second (torchelie).
    return out.reshape(N, 2 * C, oh, ow)


def _reference(x, target_size):
    """Pure-JAX reference mirroring PyTorch adaptive avg/max pool + concat([avg, max])."""
    N, C, H, W = x.shape
    oh, ow = _pair(target_size)
    avg_rows, max_rows = [], []
    for i in range(oh):
        h0, h1 = (i * H) // oh, -(-((i + 1) * H) // oh)
        avg_cols, max_cols = [], []
        for j in range(ow):
            w0, w1 = (j * W) // ow, -(-((j + 1) * W) // ow)
            win = x[:, :, h0:h1, w0:w1]
            avg_cols.append(jnp.mean(win, axis=(2, 3)))
            max_cols.append(jnp.max(win, axis=(2, 3)))
        avg_rows.append(jnp.stack(avg_cols, axis=-1))
        max_rows.append(jnp.stack(max_cols, axis=-1))
    avg = jnp.stack(avg_rows, axis=-2)
    mx = jnp.stack(max_rows, axis=-2)
    return jnp.concatenate([avg, mx], axis=1)


if __name__ == "__main__":
    key = jax.random.PRNGKey(0)
    x = jax.random.normal(key, (2, 4, 16, 16), dtype=jnp.float32)

    # 1) Divisible square target.
    out = jax.block_until_ready(adaptive_concat_pool2d(x, 2))
    ref = _reference(x, 2)
    assert out.shape == (2, 8, 2, 2), out.shape
    assert jnp.allclose(out, ref, atol=1e-5, rtol=1e-5), "mismatch vs reference (t=2)"

    # 2) Non-divisible rectangular target (overlapping adaptive windows).
    out2 = jax.block_until_ready(adaptive_concat_pool2d(x, (3, 5)))
    ref2 = _reference(x, (3, 5))
    assert out2.shape == (2, 8, 3, 5), out2.shape
    assert jnp.allclose(out2, ref2, atol=1e-5, rtol=1e-5), "mismatch vs reference (t=(3,5))"

    # 3) Batch not divisible by the chosen batch tile -> ragged last grid block.
    x3 = jax.random.normal(jax.random.PRNGKey(0), (3, 4, 16, 16), dtype=jnp.float32)
    out3 = jax.block_until_ready(adaptive_concat_pool2d(x3, 2))
    ref3 = _reference(x3, 2)
    assert out3.shape == (3, 8, 2, 2), out3.shape
    assert jnp.allclose(out3, ref3, atol=1e-5, rtol=1e-5), "mismatch vs reference (ragged N)"

    # 4) Wider channel count with a non-divisible 7x7 target.
    x4 = jax.random.normal(jax.random.PRNGKey(1), (2, 128, 32, 32), dtype=jnp.float32)
    out4 = jax.block_until_ready(adaptive_concat_pool2d(x4, 7))
    ref4 = _reference(x4, 7)
    assert out4.shape == (2, 256, 7, 7), out4.shape
    assert jnp.allclose(out4, ref4, atol=1e-4, rtol=1e-4), "mismatch vs reference (t=7)"

    print("KERNEL_OK")
</pallas_src>

<mosaic_0001>
module attributes {stable_mosaic.version = 11 : i64} {
  func.func @kernel(%arg0: i32, %arg1: i32, %arg2: memref<1x4x16x16xf32, #tpu.memory_space<vmem>>, %arg3: memref<1x2x4x4xf32, #tpu.memory_space<vmem>>) attributes {dimension_semantics = [#tpu.dimension_semantics<parallel>, #tpu.dimension_semantics<parallel>], iteration_bounds = array<i64: 2, 1>, scalar_prefetch = 0 : i64, scratch_operands = 0 : i64, tpu.core_type = #tpu.core_type<tc>, window_params = [{transform_indices = @transform_0, window_bounds = array<i64: 1, 4, 16, 16>}, {transform_indices = @transform_1, window_bounds = array<i64: 1, 2, 4, 4>}]} {
    %c0 = arith.constant 0 : index
    %c0_0 = arith.constant 0 : index
    %c0_1 = arith.constant 0 : index
    %c0_2 = arith.constant 0 : index
    %0 = vector.load %arg2[%c0, %c0_0, %c0_1, %c0_2] : memref<1x4x16x16xf32, #tpu.memory_space<vmem>>, vector<1x4x8x16xf32>
    %cst = arith.constant dense<0.000000e+00> : vector<1x4x16xf32>
    %1 = vector.multi_reduction <add>, %0, %cst [2] : vector<1x4x8x16xf32> to vector<1x4x16xf32>
    %cst_3 = arith.constant dense<0xFF800000> : vector<1x4x16xf32>
    %2 = vector.multi_reduction <maximumf>, %0, %cst_3 [2] : vector<1x4x8x16xf32> to vector<1x4x16xf32>
    %3 = vector.extract_strided_slice %1 {offsets = [0, 0, 0], sizes = [1, 4, 8], strides = [1, 1, 1]} : vector<1x4x16xf32> to vector<1x4x8xf32>
    %cst_4 = arith.constant dense<0.000000e+00> : vector<1x4xf32>
    %4 = vector.multi_reduction <add>, %3, %cst_4 [2] : vector<1x4x8xf32> to vector<1x4xf32>
    %5 = vector.extract_strided_slice %2 {offsets = [0, 0, 0], sizes = [1, 4, 8], strides = [1, 1, 1]} : vector<1x4x16xf32> to vector<1x4x8xf32>
    %cst_5 = arith.constant dense<0xFF800000> : vector<1x4xf32>
    %6 = vector.multi_reduction <maximumf>, %5, %cst_5 [2] : vector<1x4x8xf32> to vector<1x4xf32>
    %cst_6 = arith.constant 1.562500e-02 : f32
    %7 = vector.broadcast %cst_6 : f32 to vector<1x4xf32>
    %8 = arith.mulf %4, %7 : vector<1x4xf32>
    %9 = vector.extract_strided_slice %1 {offsets = [0, 0, 8], sizes = [1, 4, 8], strides = [1, 1, 1]} : vector<1x4x16xf32> to vector<1x4x8xf32>
    %cst_7 = arith.constant dense<0.000000e+00> : vector<1x4xf32>
    %10 = vector.multi_reduction <add>, %9, %cst_7 [2] : vector<1x4x8xf32> to vector<1x4xf32>
    %11 = vector.extract_strided_slice %2 {offsets = [0, 0, 8], sizes = [1, 4, 8], strides = [1, 1, 1]} : vector<1x4x16xf32> to vector<1x4x8xf32>
    %cst_8 = arith.constant dense<0xFF800000> : vector<1x4xf32>
    %12 = vector.multi_reduction <maximumf>, %11, %cst_8 [2] : vector<1x4x8xf32> to vector<1x4xf32>
    %cst_9 = arith.constant 1.562500e-02 : f32
    %13 = vector.broadcast %cst_9 : f32 to vector<1x4xf32>
    %14 = arith.mulf %10, %13 : vector<1x4xf32>
    %c0_10 = arith.constant 0 : index
    %c0_11 = arith.constant 0 : index
    %c8 = arith.constant 8 : index
    %c0_12 = arith.constant 0 : index
    %15 = vector.load %arg2[%c0_10, %c0_11, %c8, %c0_12] : memref<1x4x16x16xf32, #tpu.memory_space<vmem>>, vector<1x4x8x16xf32>
    %cst_13 = arith.constant dense<0.000000e+00> : vector<1x4x16xf32>
    %16 = vector.multi_reduction <add>, %15, %cst_13 [2] : vector<1x4x8x16xf32> to vector<1x4x16xf32>
    %cst_14 = arith.constant dense<0xFF800000> : vector<1x4x16xf32>
    %17 = vector.multi_reduction <maximumf>, %15, %cst_14 [2] : vector<1x4x8x16xf32> to vector<1x4x16xf32>
    %18 = vector.extract_strided_slice %16 {offsets = [0, 0, 0], sizes = [1, 4, 8], strides = [1, 1, 1]} : vector<1x4x16xf32> to vector<1x4x8xf32>
    %cst_15 = arith.constant dense<0.000000e+00> : vector<1x4xf32>
    %19 = vector.multi_reduction <add>, %18, %cst_15 [2] : vector<1x4x8xf32> to vector<1x4xf32>
    %20 = vector.extract_strided_slice %17 {offsets = [0, 0, 0], sizes = [1, 4, 8], strides = [1, 1, 1]} : vector<1x4x16xf32> to vector<1x4x8xf32>
    %cst_16 = arith.constant dense<0xFF800000> : vector<1x4xf32>
    %21 = vector.multi_reduction <maximumf>, %20, %cst_16 [2] : vector<1x4x8xf32> to vector<1x4xf32>
    %cst_17 = arith.constant 1.562500e-02 : f32
    %22 = vector.broadcast %cst_17 : f32 to vector<1x4xf32>
    %23 = arith.mulf %19, %22 : vector<1x4xf32>
    %24 = vector.extract_strided_slice %16 {offsets = [0, 0, 8], sizes = [1, 4, 8], strides = [1, 1, 1]} : vector<1x4x16xf32> to vector<1x4x8xf32>
    %cst_18 = arith.constant dense<0.000000e+00> : vector<1x4xf32>
    %25 = vector.multi_reduction <add>, %24, %cst_18 [2] : vector<1x4x8xf32> to vector<1x4xf32>
    %26 = vector.extract_strided_slice %17 {offsets = [0, 0, 8], sizes = [1, 4, 8], strides = [1, 1, 1]} : vector<1x4x16xf32> to vector<1x4x8xf32>
    %cst_19 = arith.constant dense<0xFF800000> : vector<1x4xf32>
    %27 = vector.multi_reduction <maximumf>, %26, %cst_19 [2] : vector<1x4x8xf32> to vector<1x4xf32>
    %cst_20 = arith.constant 1.562500e-02 : f32
    %28 = vector.broadcast %cst_20 : f32 to vector<1x4xf32>
    %29 = arith.mulf %25, %28 : vector<1x4xf32>
    %30 = vector.shape_cast %8 : vector<1x4xf32> to vector<1x4x1xf32>
    %31 = vector.shape_cast %14 : vector<1x4xf32> to vector<1x4x1xf32>
    %32 = vector.shape_cast %23 : vector<1x4xf32> to vector<1x4x1xf32>
    %33 = vector.shape_cast %29 : vector<1x4xf32> to vector<1x4x1xf32>
    %34 = tpu.concatenate %30, %31, %32, %33 in 2 : vector<1x4x1xf32>, vector<1x4x1xf32>, vector<1x4x1xf32>, vector<1x4x1xf32> -> vector<1x4x4xf32>
    %35 = vector.shape_cast %6 : vector<1x4xf32> to vector<1x4x1xf32>
    %36 = vector.shape_cast %12 : vector<1x4xf32> to vector<1x4x1xf32>
    %37 = vector.shape_cast %21 : vector<1x4xf32> to vector<1x4x1xf32>
    %38 = vector.shape_cast %27 : vector<1x4xf32> to vector<1x4x1xf32>
    %39 = tpu.concatenate %35, %36, %37, %38 in 2 : vector<1x4x1xf32>, vector<1x4x1xf32>, vector<1x4x1xf32>, vector<1x4x1xf32> -> vector<1x4x4xf32>
    %c0_21 = arith.constant 0 : index
    %c0_22 = arith.constant 0 : index
    %c0_23 = arith.constant 0 : index
    %c0_24 = arith.constant 0 : index
    %40 = vector.load %arg3[%c0_21, %c0_22, %c0_23, %c0_24] : memref<1x2x4x4xf32, #tpu.memory_space<vmem>>, vector<1x1x4x4xf32>
    %41 = vector.shape_cast %40 : vector<1x1x4x4xf32> to vector<1x4x4xf32>
    %42 = vector.shape_cast %34 : vector<1x4x4xf32> to vector<1x1x4x4xf32>
    tpu.vector_store %arg3[%c0_21, %c0_22, %c0_23, %c0_24], %42 {strides = array<i32>} : memref<1x2x4x4xf32, #tpu.memory_space<vmem>>, vector<1x1x4x4xf32>,
    %c0_25 = arith.constant 0 : index
    %c1 = arith.constant 1 : index
    %c0_26 = arith.constant 0 : index
    %c0_27 = arith.constant 0 : index
    %43 = vector.load %arg3[%c0_25, %c1, %c0_26, %c0_27] : memref<1x2x4x4xf32, #tpu.memory_space<vmem>>, vector<1x1x4x4xf32>
    %44 = vector.shape_cast %43 : vector<1x1x4x4xf32> to vector<1x4x4xf32>
    %45 = vector.shape_cast %39 : vector<1x4x4xf32> to vector<1x1x4x4xf32>
    tpu.vector_store %arg3[%c0_25, %c1, %c0_26, %c0_27], %45 {strides = array<i32>} : memref<1x2x4x4xf32, #tpu.memory_space<vmem>>, vector<1x1x4x4xf32>,
    return
  }
  func.func @transform_0(%arg0: i32, %arg1: i32) -> (i32, i32, i32, i32) {
    %c0_i32 = arith.constant 0 : i32
    %c0_i32_0 = arith.constant 0 : i32
    %c0_i32_1 = arith.constant 0 : i32
    return %arg0, %arg1, %c0_i32, %c0_i32_0 : i32, i32, i32, i32
  }
  func.func @transform_1(%arg0: i32, %arg1: i32) -> (i32, i32, i32, i32) {
    %c0_i32 = arith.constant 0 : i32
    %c0_i32_0 = arith.constant 0 : i32
    %c0_i32_1 = arith.constant 0 : i32
    return %arg0, %c0_i32, %arg1, %c0_i32_0 : i32, i32, i32, i32
  }
}

</mosaic_0001>

<llo_original>
// kernel: tpu_custom_call.1
$region0: #{tpu_custom_call.1}
  #allocation0 [shape = 'u32[]', space=smem, size = 0x4, offset = 0x4, fixed_abs, tag = 'smem constant byte address 0x4 - core index']
  #allocation1 [shape = 'u32[144,128]{1,0:T(1,128)}', space=vmem, size = 0x12000, scoped, tag = 'internal scratch']
  %s0 = inlined_call_operand.hbm [shape: f32[2,4,16,16], index: 0, kind: input, shape index: {}]
  %s1 = inlined_call_operand.hbm [shape: f32[2,2,4,4], index: 1, kind: output, shape index: {}]
  %s2 = sld [smem:[#allocation0]]
  $region41: #{tpu_custom_call.1} parent=0
    _
  %s4 = ssub.s32 1, %s2
  %s5 = scalar_select 0, %s4, %s2
  $region1: #{tpu_custom_call.1} parent=0
    #allocation2 [shape = 'u8[65536]{0}', space=vmem, size = 0x10000, scoped, tag = 'input window, operand 0']
    #allocation3 [shape = 's32[2]{0}', space=sflag, size = 0x8, scoped, tag = 'scoped memory for tpu_custom_call.1']
    #allocation4 [shape = 's32[2]{0}', space=sflag, size = 0x8, scoped, tag = 'scoped memory for tpu_custom_call.1']
    #allocation5 [shape = 'u8[8192]{0}', space=vmem, size = 0x2000, scoped, tag = 'output window, operand 0']
    %6 = vsyncpa [#allocation3], 0
    %s7 = scalar_lea.sflag [#allocation3], 1
    %8 = vsyncpa %s7, 0
    %9 = vsyncpa [#allocation4], 0
    %s10 = scalar_lea.sflag [#allocation4], 1
    %11 = vsyncpa %s10, 0
    loop: start=0, step=1, limit=4
    $region2: #{tpu_custom_call.1} parent=1 // loop_pre_header
      _
    $region3: #{tpu_custom_call.1} parent=1 // loop_header
      %s13 = sphi 0, %s17
      %p14 = scmp.ge.s32.totalorder %s13, 4
      %s20 = sphi 0, %s32
      %s21 = sphi 0, %s28
      %s22 = sphi 0, %s20
      %s23 = sphi 0, %s21
      %s24 = sphi 0, %s22
      %s25 = sphi 0, %s23
      %s37 = sphi 0, %s39
      %s40 = sphi 0, %s37
      %s41 = sphi 0, %s40
      %s57 = sphi 0, %s41
      %s65 = sphi 0, %s67
      %s68 = sphi 0, %s65
      %s69 = sphi 0, %s68
      %s85 = sphi 0, %s69
    $region4: #{tpu_custom_call.1} parent=1 // loop_header_branch
      %16 = sbr.rel (%p14) target = $region8
    $region5: #{tpu_custom_call.1} parent=1 // loop_body
      %s18 = ssub.s32 %s13, 1
      %s19 = ssub.s32 %s13, 2
      %s26 = sadd.s32 1, %s21
      %p27 = scmp.ge.s32.totalorder %s26, 1
      %s28 = scalar_select %p27, 0, %s26
      %s29 = sadd.s32 1, %s20
      %s30 = scalar_select %p27, %s29, %s20
      %p31 = scmp.ge.s32.totalorder %s30, 2
      %s32 = scalar_select %p31, 0, %s30
      %s33 = ssub.s32 %s20, %s32
      %s34 = ssub.s32 %s21, %s28
      %s35 = sor.u32 %s33, %s34
      %p36 = scmp.eq.s32.totalorder %s35, 0
      %s38 = sadd.s32 %s37, 1
      %s39 = scalar_select %p36, %s37, %s38
      %p42 = pneg %p36
      %p43 = scmp.eq.s32.totalorder %s13, 1
      %p44 = por %p42, %p43
      %p45 = scmp.ne.s32.totalorder %s37, %s40
      %p46 = scmp.eq.s32.totalorder %s13, 0
      %p47 = por %p45, %p46
      %p48 = scmp.ne.s32.totalorder %s37, %s40
      %p49 = scmp.eq.s32.totalorder %s18, 1
      %p50 = por %p48, %p49
      %p51 = scmp.ne.s32.totalorder %s40, %s41
      %p52 = scmp.eq.s32.totalorder %s18, 0
      %p53 = por %p51, %p52
      %p54 = scmp.ne.s32.totalorder %s40, %s41
      %p55 = scmp.eq.s32.totalorder %s19, 1
      %p56 = por %p54, %p55
      %p58 = scmp.ne.s32.totalorder %s41, %s57
      %p59 = scmp.eq.s32.totalorder %s19, 0
      %p60 = por %p58, %p59
      %s61 = ssub.s32 %s20, %s32
      %s62 = ssub.s32 %s21, %s28
      %s63 = sor.u32 %s61, %s62
      %p64 = scmp.eq.s32.totalorder %s63, 0
      %s66 = sadd.s32 %s65, 1
      %s67 = scalar_select %p64, %s65, %s66
      %p70 = pneg %p64
      %p71 = scmp.eq.s32.totalorder %s13, 1
      %p72 = por %p70, %p71
      %p73 = scmp.ne.s32.totalorder %s65, %s68
      %p74 = scmp.eq.s32.totalorder %s13, 0
      %p75 = por %p73, %p74
      %p76 = scmp.ne.s32.totalorder %s65, %s68
      %p77 = scmp.eq.s32.totalorder %s18, 1
      %p78 = por %p76, %p77
      %p79 = scmp.ne.s32.totalorder %s68, %s69
      %p80 = scmp.eq.s32.totalorder %s18, 0
      %p81 = por %p79, %p80
      %p82 = scmp.ne.s32.totalorder %s68, %s69
      %p83 = scmp.eq.s32.totalorder %s19, 1
      %p84 = por %p82, %p83
      %p86 = scmp.ne.s32.totalorder %s69, %s85
      %p87 = scmp.eq.s32.totalorder %s19, 0
      %p88 = por %p86, %p87
      %p89 = scmp.le.s32.totalorder 1, %s13
      %p90 = scmp.lt.s32.totalorder %s13, 3
      %p91 = pnand %p89, %p90
      %p92 = pneg %p91
      // Predicated region
      $region9: #{tpu_custom_call.1} parent=5 // pred_check
        _
      $region10: #{tpu_custom_call.1} parent=5 // pred_check_branch
        %94 = sbr.rel (%p91) target = $region12
      $region11: #{tpu_custom_call.1} parent=5 // pred_region
        %s95 = ssub.s32 %s13, 1
      $region12: #{tpu_custom_call.1} parent=5 // pred_fallthru
        _
      %p96 = scmp.lt.s32.totalorder %s13, 2
      // Predicated region
      $region13: #{tpu_custom_call.1} parent=5 // pred_check
        %p97 = pneg %p96
      $region14: #{tpu_custom_call.1} parent=5 // pred_check_branch
        %99 = sbr.rel (%p97) target = $region16
      $region15: #{tpu_custom_call.1} parent=5 // pred_region
        // Predicated region
        $region17: #{tpu_custom_call.1} parent=15 // pred_check
          %p100 = pneg %p47
        $region18: #{tpu_custom_call.1} parent=15 // pred_check_branch
          %102 = sbr.rel (%p100) target = $region20
        $region19: #{tpu_custom_call.1} parent=15 // pred_region
          %s103 = sand.u32 %s37, 1
          %s104 = scalar_lea.sflag [#allocation3], %s103
          %s105 = sand.u32 %s37, 1
          %s106 = smul.addr %s105, 64
          %s107 = scalar_lea.vmem [#allocation2], %s106
          %s108 = smul.u32 4, %s21
          %s110 = ssub.s32 1024, 1024
          %111 = vsyncadd %s104, %s110
          %s112 = smul.addr %s108, 2
          %s113 = smul.addr %s20, 8
          %s114 = sadd.s32 %s112, %s113
          %s115 = smul.addr %s114, 128
          %s116 = scalar_lea.hbm %s0, %s115
          %s117 = sshll.u32 %s107, 4
          %s118 = int_to_ptr.vmem [resolvable:$true] %s117
          %123 = dma.hbm_to_vmem [thread:$0]  %s116, 1024, %s118, %s104, 128, 128, 8
        $region20: #{tpu_custom_call.1} parent=15 // pred_fallthru
          _
      $region16: #{tpu_custom_call.1} parent=5 // pred_fallthru
        _
      %p124 = scmp.le.s32.totalorder 1, %s13
      %p125 = scmp.lt.s32.totalorder %s13, 3
      %p126 = pnand %p124, %p125
      %p127 = pneg %p126
      // Predicated region
      $region21: #{tpu_custom_call.1} parent=5 // pred_check
        _
      $region22: #{tpu_custom_call.1} parent=5 // pred_check_branch
        %129 = sbr.rel (%p126) target = $region24
      $region23: #{tpu_custom_call.1} parent=5 // pred_region
        %s130 = ssub.s32 %s13, 1
        %s131 = sand.u32 %s40, 1
        %s132 = scalar_lea.sflag [#allocation3], %s131
        %s133 = sand.u32 %s40, 1
        %s134 = smul.addr %s133, 64
        %s135 = scalar_lea.vmem [#allocation2], %s134
        // Predicated region
        $region25: #{tpu_custom_call.1} parent=23 // pred_check
          %p136 = pneg %p53
        $region26: #{tpu_custom_call.1} parent=23 // pred_check_branch
          %138 = sbr.rel (%p136) target = $region28
        $region27: #{tpu_custom_call.1} parent=23 // pred_region
          %139 = dma.done %s132, 1024
        $region28: #{tpu_custom_call.1} parent=23 // pred_fallthru
          _
        %s140 = sand.u32 %s40, 1
        %s141 = scalar_lea.sflag [#allocation3], %s140
        %s142 = sand.u32 %s40, 1
        %s143 = smul.addr %s142, 64
        %s144 = scalar_lea.vmem [#allocation2], %s143
        %p145 = pneg %p53
        %p146 = pneg %p50
        %p147 = pneg %p81
        %p148 = pneg %p78
        %s149 = sand.u32 %s68, 1
        %s150 = scalar_lea.sflag [#allocation4], %s149
        %s151 = sand.u32 %s68, 1
        %s152 = smul.addr %s151, 8
        %s153 = scalar_lea.vmem [#allocation5], %s152
        %s154 = smul.u32 4, %s23
        %v155 = vld [vmem:[%s135] sm:$0xff]
        %v156 = vld [vmem:[%s135 + $0x10] sm:$0xff]
        %v157 = vld [vmem:[%s135 + $0x20] sm:$0xff]
        %v158 = vld [vmem:[%s135 + $0x30] sm:$0xff]
        %vm159 = vcmask 130048
        %v160 = vsel %vm159, %v155, 0.0
        %v161 = vrot.slane %v160, 4
        %v162 = vadd.f32 %v160, %v161
        %v163 = vrot.slane %v162, 2
        %v164 = vadd.f32 %v162, %v163
        %v165 = vrot.slane %v164, 1
        %v166 = vadd.f32 %v164, %v165
        %v167 = vsel %vm159, %v156, 0.0
        %v168 = vrot.slane %v167, 4
        %v169 = vadd.f32 %v167, %v168
        %v170 = vrot.slane %v169, 2
        %v171 = vadd.f32 %v169, %v170
        %v172 = vrot.slane %v171, 1
        %v173 = vadd.f32 %v171, %v172
        %v174 = vsel %vm159, %v157, 0.0
        %v175 = vrot.slane %v174, 4
        %v176 = vadd.f32 %v174, %v175
        %v177 = vrot.slane %v176, 2
        %v178 = vadd.f32 %v176, %v177
        %v179 = vrot.slane %v178, 1
        %v180 = vadd.f32 %v178, %v179
        %v181 = vsel %vm159, %v158, 0.0
        %v182 = vrot.slane %v181, 4
        %v183 = vadd.f32 %v181, %v182
        %v184 = vrot.slane %v183, 2
        %v185 = vadd.f32 %v183, %v184
        %v186 = vrot.slane %v185, 1
        %v187 = vadd.f32 %v185, %v186
        %v188 = vsel %vm159, %v155, -inf
        %v189 = vrot.slane %v188, 4
        %v190 = vmax.f32 %v188, %v189
        %v191 = vrot.slane %v190, 2
        %v192 = vmax.f32 %v190, %v191
        %v193 = vrot.slane %v192, 1
        %v194 = vmax.f32 %v192, %v193
        %v195 = vsel %vm159, %v156, -inf
        %v196 = vrot.slane %v195, 4
        %v197 = vmax.f32 %v195, %v196
        %v198 = vrot.slane %v197, 2
        %v199 = vmax.f32 %v197, %v198
        %v200 = vrot.slane %v199, 1
        %v201 = vmax.f32 %v199, %v200
        %v202 = vsel %vm159, %v157, -inf
        %v203 = vrot.slane %v202, 4
        %v204 = vmax.f32 %v202, %v203
        %v205 = vrot.slane %v204, 2
        %v206 = vmax.f32 %v204, %v205
        %v207 = vrot.slane %v206, 1
        %v208 = vmax.f32 %v206, %v207
        %v209 = vsel %vm159, %v158, -inf
        %v210 = vrot.slane %v209, 4
        %v211 = vmax.f32 %v209, %v210
        %v212 = vrot.slane %v211, 2
        %v213 = vmax.f32 %v211, %v212
        %v214 = vrot.slane %v213, 1
        %v215 = vmax.f32 %v213, %v214
        %vm220 = vcmask 1041409
        %v221 = vsel %vm220, %v173, %v166
        %vm222 = vcmask 1042434
        %v223 = vsel %vm222, %v180, %v221
        %vm224 = vcmask 1043459
        %v225 = vsel %vm224, %v187, %v223
        %vm227 = vcmask 60416
        %v228 = vsel %vm227, %v225, 0.0
        %229 = vadd.xlane.f32.xlu0 %v228
        %v230 = vpop.xlane.xlu0 %229
        %v235 = vsel %vm220, %v201, %v194
        %v236 = vsel %vm222, %v208, %v235
        %v237 = vsel %vm224, %v215, %v236
        %v239 = vsel %vm227, %v237, -inf
        %240 = vmax.xlane.f32.xlu0 %v239
        %v241 = vpop.xlane.xlu0 %240
        %v242 = vmul.f32 %v230, 0.015625
        %243 = vrot.lane.b32.xlu0 %v225, 120
        %v244 = vpop.permute.xlu0 %243
        %v246 = vsel %vm227, %v244, 0.0
        %247 = vadd.xlane.f32.xlu0 %v246
        %v248 = vpop.xlane.xlu0 %247
        %vm249 = vcmask 126016
        %v250 = vsel %vm249, %v237, -inf
        %251 = vmax.xlane.f32.xlu0 %v250
        %v252 = vpop.xlane.xlu0 %251
        %v253 = vmul.f32 %v248, 0.015625
        %v254 = vld [vmem:[%s135 + $0x8] sm:$0xff]
        %v255 = vld [vmem:[%s135 + $0x18] sm:$0xff]
        %v256 = vld [vmem:[%s135 + $0x28] sm:$0xff]
        %v257 = vld [vmem:[%s135 + $0x38] sm:$0xff]
        %v258 = vsel %vm159, %v254, 0.0
        %v259 = vrot.slane %v258, 4
        %v260 = vadd.f32 %v258, %v259
        %v261 = vrot.slane %v260, 2
        %v262 = vadd.f32 %v260, %v261
        %v263 = vrot.slane %v262, 1
        %v264 = vadd.f32 %v262, %v263
        %v265 = vsel %vm159, %v255, 0.0
        %v266 = vrot.slane %v265, 4
        %v267 = vadd.f32 %v265, %v266
        %v268 = vrot.slane %v267, 2
        %v269 = vadd.f32 %v267, %v268
        %v270 = vrot.slane %v269, 1
        %v271 = vadd.f32 %v269, %v270
        %v272 = vsel %vm159, %v256, 0.0
        %v273 = vrot.slane %v272, 4
        %v274 = vadd.f32 %v272, %v273
        %v275 = vrot.slane %v274, 2
        %v276 = vadd.f32 %v274, %v275
        %v277 = vrot.slane %v276, 1
        %v278 = vadd.f32 %v276, %v277
        %v279 = vsel %vm159, %v257, 0.0
        %v280 = vrot.slane %v279, 4
        %v281 = vadd.f32 %v279, %v280
        %v282 = vrot.slane %v281, 2
        %v283 = vadd.f32 %v281, %v282
        %v284 = vrot.slane %v283, 1
        %v285 = vadd.f32 %v283, %v284
        %v286 = vsel %vm159, %v254, -inf
        %v287 = vrot.slane %v286, 4
        %v288 = vmax.f32 %v286, %v287
        %v289 = vrot.slane %v288, 2
        %v290 = vmax.f32 %v288, %v289
        %v291 = vrot.slane %v290, 1
        %v292 = vmax.f32 %v290, %v291
        %v293 = vsel %vm159, %v255, -inf
        %v294 = vrot.slane %v293, 4
        %v295 = vmax.f32 %v293, %v294
        %v296 = vrot.slane %v295, 2
        %v297 = vmax.f32 %v295, %v296
        %v298 = vrot.slane %v297, 1
        %v299 = vmax.f32 %v297, %v298
        %v300 = vsel %vm159, %v256, -inf
        %v301 = vrot.slane %v300, 4
        %v302 = vmax.f32 %v300, %v301
        %v303 = vrot.slane %v302, 2
        %v304 = vmax.f32 %v302, %v303
        %v305 = vrot.slane %v304, 1
        %v306 = vmax.f32 %v304, %v305
        %v307 = vsel %vm159, %v257, -inf
        %v308 = vrot.slane %v307, 4
        %v309 = vmax.f32 %v307, %v308
        %v310 = vrot.slane %v309, 2
        %v311 = vmax.f32 %v309, %v310
        %v312 = vrot.slane %v311, 1
        %v313 = vmax.f32 %v311, %v312
        %v318 = vsel %vm220, %v271, %v264
        %v319 = vsel %vm222, %v278, %v318
        %v320 = vsel %vm224, %v285, %v319
        %v322 = vsel %vm227, %v320, 0.0
        %323 = vadd.xlane.f32.xlu0 %v322
        %v324 = vpop.xlane.xlu0 %323
        %v329 = vsel %vm220, %v299, %v292
        %v330 = vsel %vm222, %v306, %v329
        %v331 = vsel %vm224, %v313, %v330
        %v333 = vsel %vm227, %v331, -inf
        %334 = vmax.xlane.f32.xlu0 %v333
        %v335 = vpop.xlane.xlu0 %334
        %v336 = vmul.f32 %v324, 0.015625
        %337 = vrot.lane.b32.xlu0 %v320, 120
        %v338 = vpop.permute.xlu0 %337
        %v340 = vsel %vm227, %v338, 0.0
        %341 = vadd.xlane.f32.xlu0 %v340
        %v342 = vpop.xlane.xlu0 %341
        %v343 = vsel %vm249, %v331, -inf
        %344 = vmax.xlane.f32.xlu0 %v343
        %v345 = vpop.xlane.xlu0 %344
        %v346 = vmul.f32 %v342, 0.015625
        %vm347 = vcmask 7168
        %v348 = vsel %vm347, %v242, %v253
        %vm349 = vcmask 15360
        %v350 = vsel %vm349, %v348, %v336
        %vm351 = vcmask 23552
        %v352 = vsel %vm351, %v350, %v346
        %v353 = vsel %vm347, %v241, %v252
        %v354 = vsel %vm349, %v353, %v335
        %v355 = vsel %vm351, %v354, %v345
        %vm356 = vcmask 27648
        %357 = vst.msk [vmem:[%s153] sm:$0xf] %vm356, %v352
        %s358 = scalar_lea.vmem %s153, 4 [#allocation5]
        %359 = vst.msk [vmem:[%s358] sm:$0xf] %vm356, %v355
        %s360 = sand.u32 %s68, 1
        %s361 = scalar_lea.sflag [#allocation4], %s360
        %s362 = sand.u32 %s68, 1
        %s363 = smul.addr %s362, 8
        %s364 = scalar_lea.vmem [#allocation5], %s363
        // Predicated region
        $region29: #{tpu_custom_call.1} parent=23 // pred_check
          %p365 = pneg %p78
        $region30: #{tpu_custom_call.1} parent=23 // pred_check_branch
          %367 = sbr.rel (%p365) target = $region32
        $region31: #{tpu_custom_call.1} parent=23 // pred_region
          %s369 = ssub.s32 128, 128
          %370 = vsyncadd %s361, %s369
          %s371 = smul.addr %s22, 2
          %s372 = sadd.s32 %s23, %s371
          %s373 = smul.addr %s372, 64
          %s374 = scalar_lea.hbm %s1, %s373
          %s375 = sshll.u32 %s364, 4
          %s376 = int_to_ptr.vmem [resolvable:$true] %s375
          %381 = dma.vmem_to_hbm [thread:$0]  %s376, 128, %s374, %s361, 64, 64, 4
        $region32: #{tpu_custom_call.1} parent=23 // pred_fallthru
          _
      $region24: #{tpu_custom_call.1} parent=5 // pred_fallthru
        _
      %p382 = scmp.le.s32.totalorder 2, %s13
      // Predicated region
      $region33: #{tpu_custom_call.1} parent=5 // pred_check
        %p383 = pneg %p382
      $region34: #{tpu_custom_call.1} parent=5 // pred_check_branch
        %385 = sbr.rel (%p383) target = $region36
      $region35: #{tpu_custom_call.1} parent=5 // pred_region
        %s386 = ssub.s32 %s13, 2
        // Predicated region
        $region37: #{tpu_custom_call.1} parent=35 // pred_check
          %p387 = pneg %p84
        $region38: #{tpu_custom_call.1} parent=35 // pred_check_branch
          %389 = sbr.rel (%p387) target = $region40
        $region39: #{tpu_custom_call.1} parent=35 // pred_region
          %s390 = sand.u32 %s69, 1
          %s391 = scalar_lea.sflag [#allocation4], %s390
          %s392 = sand.u32 %s69, 1
          %s393 = smul.addr %s392, 8
          %s394 = scalar_lea.vmem [#allocation5], %s393
          %395 = dma.done %s391, 128
        $region40: #{tpu_custom_call.1} parent=35 // pred_fallthru
          _
      $region36: #{tpu_custom_call.1} parent=5 // pred_fallthru
        _
    $region6: #{tpu_custom_call.1} parent=1 // loop_footer
      %s17 = sadd.s32 1, %s13
    $region7: #{tpu_custom_call.1} parent=1 // loop_footer_branch
      %12 = sbr.rel target = $region3
    $region8: #{tpu_custom_call.1} parent=1 // loop_exit
      _
    %396 = vsyncpa [#allocation3], 1
    %s397 = scalar_lea.sflag [#allocation3], 1
    %398 = vsyncpa %s397, 1
    %399 = vsyncpa [#allocation4], 1
    %s400 = scalar_lea.sflag [#allocation4], 1
    %401 = vsyncpa %s400, 1

</llo_original>
